<compile_context>
chip_gen: v6e
topology: v6e:2x2x1
jax: 0.10.0
libtpu: 0.0.40
codegen_flags: <defaults>
</compile_context>

<pallas_src>
import functools

import jax
import jax.numpy as jnp
from jax.experimental import pallas as pl
from jax.experimental.pallas import tpu as pltpu


# ----------------------------- shared math helpers ---------------------------

def _layer_norm(x, w, b, eps):
    x = x.astype(jnp.float32)
    mu = jnp.mean(x, axis=-1, keepdims=True)
    var = jnp.mean((x - mu) ** 2, axis=-1, keepdims=True)
    return (x - mu) * jax.lax.rsqrt(var + eps) * w + b


def _gelu_tanh(x):
    # matches torch.nn.functional.gelu(x, approximate='tanh')
    c = jnp.asarray(0.7978845608028654, x.dtype)  # sqrt(2/pi)
    return 0.5 * x * (1.0 + jnp.tanh(c * (x + 0.044715 * x * x * x)))


# --------------------------- patch embedding kernel --------------------------

def _patch_embed_kernel(p_ref, w_ref, b_ref, pos_ref, o_ref):
    emb = jnp.dot(p_ref[...].astype(jnp.bfloat16), w_ref[...],
                  preferred_element_type=jnp.float32)
    o_ref[...] = (emb + b_ref[...] + pos_ref[...]).astype(o_ref.dtype)


def siglip_patch_embed(patches, w, b, pos):
    B, N, K = patches.shape
    D = w.shape[1]
    return pl.pallas_call(
        _patch_embed_kernel,
        out_shape=jax.ShapeDtypeStruct((B, N, D), jnp.float32),
        grid_spec=pltpu.PrefetchScalarGridSpec(
            num_scalar_prefetch=0,
            grid=(B,),
            in_specs=[
                pl.BlockSpec((pl.Squeezed(), N, K), lambda b: (b, 0, 0)),
                pl.BlockSpec((K, D), lambda b: (0, 0)),
                pl.BlockSpec((1, D), lambda b: (0, 0)),
                pl.BlockSpec((N, D), lambda b: (0, 0)),
            ],
            out_specs=pl.BlockSpec((pl.Squeezed(), N, D), lambda b: (b, 0, 0)),
        ),
        compiler_params=pltpu.CompilerParams(
            dimension_semantics=("parallel",),
            vmem_limit_bytes=64 * 1024 * 1024,
        ),
    )(patches, w, b, pos)


# --------------------------- fused encoder layer kernel -----------------------

LAYER_PARAM_ORDER = ("ln1_w", "ln1_b", "wqkv", "bqkv", "wo", "bo",
                     "ln2_w", "ln2_b", "w1", "b1", "w2", "b2")


def _encoder_layer_kernel(x_ref,
                          ln1_w, ln1_b, wqkv, bqkv, wo, bo,
                          ln2_w, ln2_b, w1, b1, w2, b2,
                          o_ref,
                          q_scr, k_scr, v_scr, attn_scr,
                          *, num_heads, head_dim, hidden, q_tile, eps, scale):
    qi = pl.program_id(1)
    D = hidden
    hd = head_dim

    # ---- once per batch element: LN1 + fused QKV projection for the full seq ----
    @pl.when(qi == 0)
    def _compute_qkv():
        h = _layer_norm(x_ref[...], ln1_w[...], ln1_b[...], eps)          # (S, D) f32
        qkv = jnp.dot(h.astype(jnp.bfloat16), wqkv[...],
                      preferred_element_type=jnp.float32) + bqkv[...]     # (S, 3D) f32
        qkv = qkv.astype(jnp.bfloat16)
        for hh in range(num_heads):                                       # head-major scratch
            q_scr[hh] = qkv[:, hh * hd:(hh + 1) * hd]
            k_scr[hh] = qkv[:, D + hh * hd:D + (hh + 1) * hd]
            v_scr[hh] = qkv[:, 2 * D + hh * hd:2 * D + (hh + 1) * hd]

    # ---- per query tile ----
    start = pl.multiple_of(qi * q_tile, q_tile)
    residual = x_ref[pl.ds(start, q_tile), :]                             # (TQ, D) f32

    q = q_scr[:, pl.ds(start, q_tile), :]                                 # (H, TQ, hd) bf16
    k = k_scr[...]                                                        # (H, S, hd) bf16
    v = v_scr[...]                                                        # (H, S, hd) bf16

    s = jnp.einsum("hqd,hkd->hqk", q, k,
                   preferred_element_type=jnp.float32) * scale            # (H, TQ, S) f32
    s = s - jnp.max(s, axis=-1, keepdims=True)
    p = jnp.exp(s)
    p = p * pl.reciprocal(jnp.sum(p, axis=-1, keepdims=True), approx=True)
    o = jnp.einsum("hqk,hkd->hqd", p.astype(jnp.bfloat16), v,
                   preferred_element_type=jnp.float32)                    # (H, TQ, hd) f32

    # merge heads into a lane-dense (TQ, D) scratch (no concatenate)
    for hh in range(num_heads):
        attn_scr[:, hh * hd:(hh + 1) * hd] = o[hh].astype(jnp.bfloat16)

    attn = jnp.dot(attn_scr[...], wo[...],
                   preferred_element_type=jnp.float32) + bo[...]          # (TQ, D) f32

    x1 = attn + residual

    # ---- LN2 + MLP ----
    h2 = _layer_norm(x1, ln2_w[...], ln2_b[...], eps)
    m = jnp.dot(h2.astype(jnp.bfloat16), w1[...],
                preferred_element_type=jnp.float32) + b1[...]
    m = _gelu_tanh(m)
    m = jnp.dot(m.astype(jnp.bfloat16), w2[...],
                preferred_element_type=jnp.float32) + b2[...]

    o_ref[...] = (m + x1).astype(o_ref.dtype)


def siglip_encoder_layer(x, layer_params, *, num_heads, eps, q_tile=None):
    B, S, D = x.shape
    assert D % num_heads == 0
    head_dim = D // num_heads
    scale = head_dim ** (-0.5)
    if q_tile is None:
        q_tile = min(S, 128)
    assert S % q_tile == 0
    n_q = S // q_tile

    plist = [layer_params[name] for name in LAYER_PARAM_ORDER]

    def invariant_spec(arr):
        nd = arr.ndim
        return pl.BlockSpec(arr.shape, lambda b, qi, _nd=nd: (0,) * _nd)

    in_specs = ([pl.BlockSpec((pl.Squeezed(), S, D), lambda b, qi: (b, 0, 0))]
                + [invariant_spec(a) for a in plist])
    out_specs = pl.BlockSpec((pl.Squeezed(), q_tile, D), lambda b, qi: (b, qi, 0))

    kernel = functools.partial(_encoder_layer_kernel,
                               num_heads=num_heads, head_dim=head_dim,
                               hidden=D, q_tile=q_tile, eps=eps, scale=scale)

    return pl.pallas_call(
        kernel,
        out_shape=jax.ShapeDtypeStruct((B, S, D), x.dtype),
        grid_spec=pltpu.PrefetchScalarGridSpec(
            num_scalar_prefetch=0,
            grid=(B, n_q),
            in_specs=in_specs,
            out_specs=out_specs,
            scratch_shapes=[
                pltpu.VMEM((num_heads, S, head_dim), jnp.bfloat16),   # Q (head-major)
                pltpu.VMEM((num_heads, S, head_dim), jnp.bfloat16),   # K
                pltpu.VMEM((num_heads, S, head_dim), jnp.bfloat16),   # V
                pltpu.VMEM((q_tile, D), jnp.bfloat16),                # merged attn heads
            ],
        ),
        compiler_params=pltpu.CompilerParams(
            dimension_semantics=("parallel", "arbitrary"),
            vmem_limit_bytes=64 * 1024 * 1024,
        ),
    )(x, *plist)


# ----------------------------- post layernorm kernel --------------------------

def _post_ln_kernel(x_ref, w_ref, b_ref, o_ref, *, eps):
    o_ref[...] = _layer_norm(x_ref[...], w_ref[...], b_ref[...], eps).astype(o_ref.dtype)


def siglip_post_layernorm(x, w, b, *, eps):
    B, S, D = x.shape
    return pl.pallas_call(
        functools.partial(_post_ln_kernel, eps=eps),
        out_shape=jax.ShapeDtypeStruct((B, S, D), x.dtype),
        grid_spec=pltpu.PrefetchScalarGridSpec(
            num_scalar_prefetch=0,
            grid=(B,),
            in_specs=[
                pl.BlockSpec((pl.Squeezed(), S, D), lambda b: (b, 0, 0)),
                pl.BlockSpec((1, D), lambda b: (0, 0)),
                pl.BlockSpec((1, D), lambda b: (0, 0)),
            ],
            out_specs=pl.BlockSpec((pl.Squeezed(), S, D), lambda b: (b, 0, 0)),
        ),
        compiler_params=pltpu.CompilerParams(
            dimension_semantics=("parallel",),
            vmem_limit_bytes=64 * 1024 * 1024,
        ),
    )(x, w, b)


# ------------------------------- model wrapper --------------------------------

def _extract_patches(pixel_values, patch):
    # TODO(synk): space-to-depth for the stride=P "valid" conv is a pure layout
    # transform; done with XLA reshape/transpose in the wrapper (not a kernel).
    B, C, H, W = pixel_values.shape
    hp, wp = H // patch, W // patch
    p = pixel_values.reshape(B, C, hp, patch, wp, patch)
    p = p.transpose(0, 2, 4, 1, 3, 5)                 # (B, hp, wp, C, ph, pw)
    return p.reshape(B, hp * wp, C * patch * patch)   # matches conv weight flatten order


def siglip_vision_model(pixel_values, params, *, patch_size, num_heads, eps, q_tile=None):
    patches = _extract_patches(pixel_values, patch_size)
    x = siglip_patch_embed(patches, params["patch_w"], params["patch_b"], params["pos_emb"])
    for lp in params["layers"]:
        x = siglip_encoder_layer(x, lp, num_heads=num_heads, eps=eps, q_tile=q_tile)
    return siglip_post_layernorm(x, params["post_ln_w"], params["post_ln_b"], eps=eps)


# --------------------------- reference (plain JAX) -----------------------------

def _mm(a, b):
    # same numerics as the kernel: bf16 operands, f32 accumulation
    return jnp.dot(a.astype(jnp.bfloat16), b.astype(jnp.bfloat16),
                   preferred_element_type=jnp.float32)


def _ref_encoder_layer(x, p, *, num_heads, eps):
    B, S, D = x.shape
    hd = D // num_heads
    scale = hd ** (-0.5)

    residual = x
    h = _layer_norm(x, p["ln1_w"], p["ln1_b"], eps)
    qkv = _mm(h, p["wqkv"]) + p["bqkv"]
    q, k, v = qkv[..., :D], qkv[..., D:2 * D], qkv[..., 2 * D:]

    def split_heads(t):
        return t.reshape(B, S, num_heads, hd).transpose(0, 2, 1, 3).astype(jnp.bfloat16)

    q, k, v = split_heads(q), split_heads(k), split_heads(v)
    s = jnp.einsum("bhqd,bhkd->bhqk", q, k, preferred_element_type=jnp.float32) * scale
    pw = jax.nn.softmax(s, axis=-1)
    o = jnp.einsum("bhqk,bhkd->bhqd", pw.astype(jnp.bfloat16), v,
                   preferred_element_type=jnp.float32)
    o = o.transpose(0, 2, 1, 3).reshape(B, S, D)
    o = _mm(o, p["wo"]) + p["bo"]
    x = o + residual

    residual = x
    h = _layer_norm(x, p["ln2_w"], p["ln2_b"], eps)
    h = _mm(h, p["w1"]) + p["b1"]
    h = _gelu_tanh(h)
    h = _mm(h, p["w2"]) + p["b2"]
    return h + residual


def reference_vision_model(pixel_values, params, *, patch_size, num_heads, eps):
    patches = _extract_patches(pixel_values, patch_size)
    x = _mm(patches, params["patch_w"]) + params["patch_b"] + params["pos_emb"]
    for lp in params["layers"]:
        x = _ref_encoder_layer(x, lp, num_heads=num_heads, eps=eps)
    return _layer_norm(x, params["post_ln_w"], params["post_ln_b"], eps)


# ----------------------------------- main -------------------------------------

if __name__ == "__main__":
    # small, consistent config
    B, C = 2, 3
    image_size, patch_size = 64, 16          # -> 16 patches (seq len 16)
    D, num_heads, intermediate = 128, 4, 256
    num_layers = 2
    eps = 1e-6

    N = (image_size // patch_size) ** 2
    Cpp = C * patch_size * patch_size

    keys = iter(jax.random.split(jax.random.PRNGKey(0), 128))

    def normal(shape, scale=0.02, dtype=jnp.float32):
        return (jax.random.normal(next(keys), shape, jnp.float32) * scale).astype(dtype)

    params = {
        "patch_w": normal((Cpp, D), dtype=jnp.bfloat16),
        "patch_b": normal((1, D)),
        "pos_emb": normal((N, D)),
        "post_ln_w": 1.0 + normal((1, D), scale=0.1),
        "post_ln_b": normal((1, D), scale=0.05),
        "layers": [],
    }
    for _ in range(num_layers):
        wq, wk, wv = normal((D, D)), normal((D, D)), normal((D, D))
        bq, bk, bv = normal((1, D)), normal((1, D)), normal((1, D))
        params["layers"].append({
            "ln1_w": 1.0 + normal((1, D), scale=0.1),
            "ln1_b": normal((1, D), scale=0.05),
            # fused QKV: pre-concatenated [wq | wk | wv] -> one MXU pass with N = 3D
            "wqkv": jnp.concatenate([wq, wk, wv], axis=1).astype(jnp.bfloat16),
            "bqkv": jnp.concatenate([bq, bk, bv], axis=1),
            "wo": normal((D, D), dtype=jnp.bfloat16),
            "bo": normal((1, D)),
            "ln2_w": 1.0 + normal((1, D), scale=0.1),
            "ln2_b": normal((1, D), scale=0.05),
            "w1": normal((D, intermediate), dtype=jnp.bfloat16),
            "b1": normal((1, intermediate)),
            "w2": normal((intermediate, D), dtype=jnp.bfloat16),
            "b2": normal((1, D)),
        })

    pixel_values = jax.random.normal(next(keys), (B, C, image_size, image_size), jnp.float32)

    # q_tile=8 -> 2 query tiles per batch element (exercises the seq tiling path)
    out = siglip_vision_model(pixel_values, params, patch_size=patch_size,
                              num_heads=num_heads, eps=eps, q_tile=8)
    out = jax.block_until_ready(out)

    ref = reference_vision_model(pixel_values, params, patch_size=patch_size,
                                 num_heads=num_heads, eps=eps)

    assert out.shape == (B, N, D)
    max_err = float(jnp.max(jnp.abs(out - ref)))
    assert jnp.allclose(out, ref, atol=1e-2, rtol=1e-2), max_err

    print("KERNEL_OK")
</pallas_src>

<mosaic_0001>
module attributes {stable_mosaic.version = 11 : i64} {
  func.func @_patch_embed_kernel(%arg0: i32, %arg1: memref<1x16x768xf32, #tpu.memory_space<vmem>>, %arg2: memref<768x128xbf16, #tpu.memory_space<vmem>>, %arg3: memref<1x128xf32, #tpu.memory_space<vmem>>, %arg4: memref<16x128xf32, #tpu.memory_space<vmem>>, %arg5: memref<1x16x128xf32, #tpu.memory_space<vmem>>) attributes {dimension_semantics = [#tpu.dimension_semantics<parallel>], iteration_bounds = array<i64: 2>, scalar_prefetch = 0 : i64, scratch_operands = 0 : i64, tpu.core_type = #tpu.core_type<tc>, window_params = [{transform_indices = @transform_0, window_bounds = array<i64: 1, 16, 768>}, {pipeline_mode = #tpu.pipeline_mode<synchronous>, transform_indices = @transform_1, window_bounds = array<i64: 768, 128>}, {pipeline_mode = #tpu.pipeline_mode<synchronous>, transform_indices = @transform_2, window_bounds = array<i64: 1, 128>}, {pipeline_mode = #tpu.pipeline_mode<synchronous>, transform_indices = @transform_3, window_bounds = array<i64: 16, 128>}, {transform_indices = @transform_4, window_bounds = array<i64: 1, 16, 128>}]} {
    %c0 = arith.constant 0 : index
    %c0_0 = arith.constant 0 : index
    %c0_1 = arith.constant 0 : index
    %0 = vector.load %arg1[%c0, %c0_0, %c0_1] : memref<1x16x768xf32, #tpu.memory_space<vmem>>, vector<1x16x768xf32>
    %1 = vector.shape_cast %0 : vector<1x16x768xf32> to vector<16x768xf32>
    %2 = arith.truncf %1 : vector<16x768xf32> to vector<16x768xbf16>
    %c0_2 = arith.constant 0 : index
    %c0_3 = arith.constant 0 : index
    %3 = vector.load %arg2[%c0_2, %c0_3] : memref<768x128xbf16, #tpu.memory_space<vmem>>, vector<768x128xbf16>
    %cst = arith.constant dense<0.000000e+00> : vector<16x128xf32>
    %4 = tpu.matmul %2, %3, %cst {dimension_numbers = #tpu.dot_dimension_numbers<[1], [0], [0], [1], [0, 0, 1, 1], [], []>} : vector<16x768xbf16>, vector<768x128xbf16>, vector<16x128xf32> -> vector<16x128xf32>
    %c0_4 = arith.constant 0 : index
    %c0_5 = arith.constant 0 : index
    %5 = vector.load %arg3[%c0_4, %c0_5] : memref<1x128xf32, #tpu.memory_space<vmem>>, vector<1x128xf32>
    %6 = vector.broadcast %5 : vector<1x128xf32> to vector<16x128xf32>
    %7 = arith.addf %4, %6 : vector<16x128xf32>
    %c0_6 = arith.constant 0 : index
    %c0_7 = arith.constant 0 : index
    %8 = vector.load %arg4[%c0_6, %c0_7] : memref<16x128xf32, #tpu.memory_space<vmem>>, vector<16x128xf32>
    %9 = arith.addf %7, %8 : vector<16x128xf32>
    %c0_8 = arith.constant 0 : index
    %c0_9 = arith.constant 0 : index
    %c0_10 = arith.constant 0 : index
    %10 = vector.load %arg5[%c0_8, %c0_9, %c0_10] : memref<1x16x128xf32, #tpu.memory_space<vmem>>, vector<1x16x128xf32>
    %11 = vector.shape_cast %10 : vector<1x16x128xf32> to vector<16x128xf32>
    %12 = vector.shape_cast %9 : vector<16x128xf32> to vector<1x16x128xf32>
    tpu.vector_store %arg5[%c0_8, %c0_9, %c0_10], %12 {strides = array<i32>} : memref<1x16x128xf32, #tpu.memory_space<vmem>>, vector<1x16x128xf32>,
    return
  }
  func.func @transform_0(%arg0: i32) -> (i32, i32, i32) {
    %c0_i32 = arith.constant 0 : i32
    %c0_i32_0 = arith.constant 0 : i32
    %c0_i32_1 = arith.constant 0 : i32
    return %arg0, %c0_i32, %c0_i32_0 : i32, i32, i32
  }
  func.func @transform_1(%arg0: i32) -> (i32, i32) {
    %c0_i32 = arith.constant 0 : i32
    %c0_i32_0 = arith.constant 0 : i32
    %c0_i32_1 = arith.constant 0 : i32
    return %c0_i32, %c0_i32_0 : i32, i32
  }
  func.func @transform_2(%arg0: i32) -> (i32, i32) {
    %c0_i32 = arith.constant 0 : i32
    %c0_i32_0 = arith.constant 0 : i32
    %c0_i32_1 = arith.constant 0 : i32
    return %c0_i32, %c0_i32_0 : i32, i32
  }
  func.func @transform_3(%arg0: i32) -> (i32, i32) {
    %c0_i32 = arith.constant 0 : i32
    %c0_i32_0 = arith.constant 0 : i32
    %c0_i32_1 = arith.constant 0 : i32
    return %c0_i32, %c0_i32_0 : i32, i32
  }
  func.func @transform_4(%arg0: i32) -> (i32, i32, i32) {
    %c0_i32 = arith.constant 0 : i32
    %c0_i32_0 = arith.constant 0 : i32
    %c0_i32_1 = arith.constant 0 : i32
    return %arg0, %c0_i32, %c0_i32_0 : i32, i32, i32
  }
}

</mosaic_0001>

<llo_original>
// kernel: tpu_custom_call.1
$region0: #{tpu_custom_call.1}
  #allocation0 [shape = 'u32[]', space=smem, size = 0x4, offset = 0x4, fixed_abs, tag = 'smem constant byte address 0x4 - core index']
  #allocation1 [shape = 'u32[144,128]{1,0:T(1,128)}', space=vmem, size = 0x12000, scoped, tag = 'internal scratch']
  %s0 = inlined_call_operand.hbm [shape: f32[2,16,768], index: 0, kind: input, shape index: {}]
  %s1 = inlined_call_operand.hbm [shape: bf16[768,128], index: 1, kind: input, shape index: {}]
  %s2 = inlined_call_operand.vmem [shape: f32[1,128], index: 2, kind: input, shape index: {}]
  %s3 = inlined_call_operand.hbm [shape: f32[16,128], index: 3, kind: input, shape index: {}]
  %s4 = inlined_call_operand.hbm [shape: f32[2,16,128], index: 4, kind: output, shape index: {}]
  %s5 = sld [smem:[#allocation0]]
  $region61: #{tpu_custom_call.1} parent=0
    _
  %s7 = ssub.s32 1, %s5
  %s8 = scalar_select 0, %s7, %s5
  $region1: #{tpu_custom_call.1} parent=0
    #allocation2 [shape = 'u8[98304]{0}', space=vmem, size = 0x18000, scoped, tag = 'input window, operand 0']
    #allocation3 [shape = 's32[2]{0}', space=sflag, size = 0x8, scoped, tag = 'scoped memory for tpu_custom_call.1']
    #allocation4 [shape = 's32[2]{0}', space=sflag, size = 0x8, scoped, tag = 'scoped memory for tpu_custom_call.1']
    #allocation5 [shape = 'u8[196608]{0}', space=vmem, size = 0x30000, scoped, tag = 'input window, operand 1, single buffered']
    #allocation6 [shape = 's32[1]{0}', space=sflag, size = 0x4, scoped, tag = 'scoped memory for tpu_custom_call.1']
    #allocation7 [shape = 'u8[8192]{0}', space=vmem, size = 0x2000, scoped, tag = 'input window, operand 3, single buffered']
    #allocation8 [shape = 'u8[16384]{0}', space=vmem, size = 0x4000, scoped, tag = 'output window, operand 0']
    %9 = vsyncpa [#allocation3], 0
    %s10 = scalar_lea.sflag [#allocation3], 1
    %11 = vsyncpa %s10, 0
    %12 = vsyncpa [#allocation6], 0
    %13 = vsyncpa [#allocation4], 0
    %s14 = scalar_lea.sflag [#allocation4], 1
    %15 = vsyncpa %s14, 0
    loop: start=0, step=1, limit=4
    $region2: #{tpu_custom_call.1} parent=1 // loop_pre_header
      _
    $region3: #{tpu_custom_call.1} parent=1 // loop_header
      %s17 = sphi 0, %s21
      %p18 = scmp.ge.s32.totalorder %s17, 4
      %s27 = sphi 0, %s29
      %s30 = sphi 0, %s27
      %s31 = sphi 0, %s30
      %s47 = sphi 0, %s31
      %s51 = sphi 0, %s51
      %s53 = sphi 0, %s51
      %s54 = sphi 0, %s53
      %s68 = sphi 0, %s54
      %s72 = sphi 0, %s72
      %s74 = sphi 0, %s72
      %s75 = sphi 0, %s74
      %s89 = sphi 0, %s75
      %s93 = sphi 0, %s93
      %s95 = sphi 0, %s93
      %s96 = sphi 0, %s95
      %s110 = sphi 0, %s96
      %s116 = sphi 0, %s118
      %s119 = sphi 0, %s116
      %s120 = sphi 0, %s119
      %s136 = sphi 0, %s120
    $region4: #{tpu_custom_call.1} parent=1 // loop_header_branch
      %20 = sbr.rel (%p18) target = $region8
    $region5: #{tpu_custom_call.1} parent=1 // loop_body
      %s22 = ssub.s32 %s17, 1
      %s23 = ssub.s32 %s17, 2
      %s24 = sadd.s32 %s17, 1
      %s25 = ssub.s32 %s17, %s24
      %p26 = scmp.eq.s32.totalorder %s25, 0
      %s28 = sadd.s32 %s27, 1
      %s29 = scalar_select %p26, %s27, %s28
      %p32 = pneg %p26
      %p33 = scmp.eq.s32.totalorder %s17, 1
      %p34 = por %p32, %p33
      %p35 = scmp.ne.s32.totalorder %s27, %s30
      %p36 = scmp.eq.s32.totalorder %s17, 0
      %p37 = por %p35, %p36
      %p38 = scmp.ne.s32.totalorder %s27, %s30
      %p39 = scmp.eq.s32.totalorder %s22, 1
      %p40 = por %p38, %p39
      %p41 = scmp.ne.s32.totalorder %s30, %s31
      %p42 = scmp.eq.s32.totalorder %s22, 0
      %p43 = por %p41, %p42
      %p44 = scmp.ne.s32.totalorder %s30, %s31
      %p45 = scmp.eq.s32.totalorder %s23, 1
      %p46 = por %p44, %p45
      %p48 = scmp.ne.s32.totalorder %s31, %s47
      %p49 = scmp.eq.s32.totalorder %s23, 0
      %p50 = por %p48, %p49
      %s52 = sadd.s32 %s51, 1
      %p55 = scmp.eq.s32.totalorder %s17, 1
      %p56 = scmp.ne.s32.totalorder %s51, %s53
      %p57 = scmp.eq.s32.totalorder %s17, 0
      %p58 = por %p56, %p57
      %p59 = scmp.ne.s32.totalorder %s51, %s53
      %p60 = scmp.eq.s32.totalorder %s22, 1
      %p61 = por %p59, %p60
      %p62 = scmp.ne.s32.totalorder %s53, %s54
      %p63 = scmp.eq.s32.totalorder %s22, 0
      %p64 = por %p62, %p63
      %p65 = scmp.ne.s32.totalorder %s53, %s54
      %p66 = scmp.eq.s32.totalorder %s23, 1
      %p67 = por %p65, %p66
      %p69 = scmp.ne.s32.totalorder %s54, %s68
      %p70 = scmp.eq.s32.totalorder %s23, 0
      %p71 = por %p69, %p70
      %s73 = sadd.s32 %s72, 1
      %p76 = scmp.eq.s32.totalorder %s17, 1
      %p77 = scmp.ne.s32.totalorder %s72, %s74
      %p78 = scmp.eq.s32.totalorder %s17, 0
      %p79 = por %p77, %p78
      %p80 = scmp.ne.s32.totalorder %s72, %s74
      %p81 = scmp.eq.s32.totalorder %s22, 1
      %p82 = por %p80, %p81
      %p83 = scmp.ne.s32.totalorder %s74, %s75
      %p84 = scmp.eq.s32.totalorder %s22, 0
      %p85 = por %p83, %p84
      %p86 = scmp.ne.s32.totalorder %s74, %s75
      %p87 = scmp.eq.s32.totalorder %s23, 1
      %p88 = por %p86, %p87
      %p90 = scmp.ne.s32.totalorder %s75, %s89
      %p91 = scmp.eq.s32.totalorder %s23, 0
      %p92 = por %p90, %p91
      %s94 = sadd.s32 %s93, 1
      %p97 = scmp.eq.s32.totalorder %s17, 1
      %p98 = scmp.ne.s32.totalorder %s93, %s95
      %p99 = scmp.eq.s32.totalorder %s17, 0
      %p100 = por %p98, %p99
      %p101 = scmp.ne.s32.totalorder %s93, %s95
      %p102 = scmp.eq.s32.totalorder %s22, 1
      %p103 = por %p101, %p102
      %p104 = scmp.ne.s32.totalorder %s95, %s96
      %p105 = scmp.eq.s32.totalorder %s22, 0
      %p106 = por %p104, %p105
      %p107 = scmp.ne.s32.totalorder %s95, %s96
      %p108 = scmp.eq.s32.totalorder %s23, 1
      %p109 = por %p107, %p108
      %p111 = scmp.ne.s32.totalorder %s96, %s110
      %p112 = scmp.eq.s32.totalorder %s23, 0
      %p113 = por %p111, %p112
      %s114 = ssub.s32 %s17, %s24
      %p115 = scmp.eq.s32.totalorder %s114, 0
      %s117 = sadd.s32 %s116, 1
      %s118 = scalar_select %p115, %s116, %s117
      %p121 = pneg %p115
      %p122 = scmp.eq.s32.totalorder %s17, 1
      %p123 = por %p121, %p122
      %p124 = scmp.ne.s32.totalorder %s116, %s119
      %p125 = scmp.eq.s32.totalorder %s17, 0
      %p126 = por %p124, %p125
      %p127 = scmp.ne.s32.totalorder %s116, %s119
      %p128 = scmp.eq.s32.totalorder %s22, 1
      %p129 = por %p127, %p128
      %p130 = scmp.ne.s32.totalorder %s119, %s120
      %p131 = scmp.eq.s32.totalorder %s22, 0
      %p132 = por %p130, %p131
      %p133 = scmp.ne.s32.totalorder %s119, %s120
      %p134 = scmp.eq.s32.totalorder %s23, 1
      %p135 = por %p133, %p134
      %p137 = scmp.ne.s32.totalorder %s120, %s136
      %p138 = scmp.eq.s32.totalorder %s23, 0
      %p139 = por %p137, %p138
      %p140 = scmp.le.s32.totalorder 1, %s17
      %p141 = scmp.lt.s32.totalorder %s17, 3
      %p142 = pnand %p140, %p141
      %p143 = pneg %p142
      // Predicated region
      $region9: #{tpu_custom_call.1} parent=5 // pred_check
        _
      $region10: #{tpu_custom_call.1} parent=5 // pred_check_branch
        %145 = sbr.rel (%p142) target = $region12
      $region11: #{tpu_custom_call.1} parent=5 // pred_region
        %s146 = ssub.s32 %s17, 1
        // Predicated region
        $region13: #{tpu_custom_call.1} parent=11 // pred_check
          %p147 = pneg %p64
        $region14: #{tpu_custom_call.1} parent=11 // pred_check_branch
          %149 = sbr.rel (%p147) target = $region16
        $region15: #{tpu_custom_call.1} parent=11 // pred_region
          %s151 = ssub.s32 6144, 6144
          %152 = vsyncadd [#allocation6], %s151
          %s153 = sshll.u32 [#allocation5], 4
          %s154 = int_to_ptr.vmem [resolvable:$true] %s153
          %159 = dma.hbm_to_vmem [thread:$0]  %s1, 6144, %s154, [#allocation6], 64, 64, 4
        $region16: #{tpu_custom_call.1} parent=11 // pred_fallthru
          _
        // Predicated region
        $region17: #{tpu_custom_call.1} parent=11 // pred_check
          %p160 = pneg %p85
        $region18: #{tpu_custom_call.1} parent=11 // pred_check_branch
          %162 = sbr.rel (%p160) target = $region20
        $region19: #{tpu_custom_call.1} parent=11 // pred_region
          _
        $region20: #{tpu_custom_call.1} parent=11 // pred_fallthru
          _
        // Predicated region
        $region21: #{tpu_custom_call.1} parent=11 // pred_check
          %p163 = pneg %p106
        $region22: #{tpu_custom_call.1} parent=11 // pred_check_branch
          %165 = sbr.rel (%p163) target = $region24
        $region23: #{tpu_custom_call.1} parent=11 // pred_region
          %s167 = ssub.s32 256, 256
          %168 = vsyncadd [#allocation6], %s167
          %s169 = sshll.u32 [#allocation7], 4
          %s170 = int_to_ptr.vmem [resolvable:$true] %s169
          %175 = dma.hbm_to_vmem [thread:$0]  %s3, 256, %s170, [#allocation6], 128, 128, 8
        $region24: #{tpu_custom_call.1} parent=11 // pred_fallthru
          _
      $region12: #{tpu_custom_call.1} parent=5 // pred_fallthru
        _
      %p176 = scmp.lt.s32.totalorder %s17, 2
      // Predicated region
      $region25: #{tpu_custom_call.1} parent=5 // pred_check
        %p177 = pneg %p176
      $region26: #{tpu_custom_call.1} parent=5 // pred_check_branch
        %179 = sbr.rel (%p177) target = $region28
      $region27: #{tpu_custom_call.1} parent=5 // pred_region
        // Predicated region
        $region29: #{tpu_custom_call.1} parent=27 // pred_check
          %p180 = pneg %p37
        $region30: #{tpu_custom_call.1} parent=27 // pred_check_branch
          %182 = sbr.rel (%p180) target = $region32
        $region31: #{tpu_custom_call.1} parent=27 // pred_region
          %s183 = sand.u32 %s27, 1
          %s184 = scalar_lea.sflag [#allocation3], %s183
          %s185 = sand.u32 %s27, 1
          %s186 = smul.addr %s185, 96
          %s187 = scalar_lea.vmem [#allocation2], %s186
          %s189 = ssub.s32 1536, 1536
          %190 = vsyncadd %s184, %s189
          %s191 = smul.addr %s17, 12
          %s192 = smul.addr %s191, 128
          %s193 = scalar_lea.hbm %s0, %s192
          %s194 = sshll.u32 %s187, 4
          %s195 = int_to_ptr.vmem [resolvable:$true] %s194
          %200 = dma.hbm_to_vmem [thread:$0]  %s193, 1536, %s195, %s184, 768, 768, 48
        $region32: #{tpu_custom_call.1} parent=27 // pred_fallthru
          _
      $region28: #{tpu_custom_call.1} parent=5 // pred_fallthru
        _
      %p201 = scmp.le.s32.totalorder 1, %s17
      %p202 = scmp.lt.s32.totalorder %s17, 3
      %p203 = pnand %p201, %p202
      %p204 = pneg %p203
      // Predicated region
      $region33: #{tpu_custom_call.1} parent=5 // pred_check
        _
      $region34: #{tpu_custom_call.1} parent=5 // pred_check_branch
        %206 = sbr.rel (%p203) target = $region36
      $region35: #{tpu_custom_call.1} parent=5 // pred_region
        %s207 = ssub.s32 %s17, 1
        %s208 = sand.u32 %s30, 1
        %s209 = scalar_lea.sflag [#allocation3], %s208
        %s210 = sand.u32 %s30, 1
        %s211 = smul.addr %s210, 96
        %s212 = scalar_lea.vmem [#allocation2], %s211
        // Predicated region
        $region37: #{tpu_custom_call.1} parent=35 // pred_check
          %p213 = pneg %p43
        $region38: #{tpu_custom_call.1} parent=35 // pred_check_branch
          %215 = sbr.rel (%p213) target = $region40
        $region39: #{tpu_custom_call.1} parent=35 // pred_region
          %216 = dma.done %s209, 1536
        $region40: #{tpu_custom_call.1} parent=35 // pred_fallthru
          _
        // Predicated region
        $region41: #{tpu_custom_call.1} parent=35 // pred_check
          %p217 = pneg %p64
        $region42: #{tpu_custom_call.1} parent=35 // pred_check_branch
          %219 = sbr.rel (%p217) target = $region44
        $region43: #{tpu_custom_call.1} parent=35 // pred_region
          %220 = dma.done [#allocation6], 6144
        $region44: #{tpu_custom_call.1} parent=35 // pred_fallthru
          _
        // Predicated region
        $region45: #{tpu_custom_call.1} parent=35 // pred_check
          %p221 = pneg %p106
        $region46: #{tpu_custom_call.1} parent=35 // pred_check_branch
          %223 = sbr.rel (%p221) target = $region48
        $region47: #{tpu_custom_call.1} parent=35 // pred_region
          %224 = dma.done [#allocation6], 256
        $region48: #{tpu_custom_call.1} parent=35 // pred_fallthru
          _
        %s225 = sand.u32 %s30, 1
        %s226 = scalar_lea.sflag [#allocation3], %s225
        %s227 = sand.u32 %s30, 1
        %s228 = smul.addr %s227, 96
        %s229 = scalar_lea.vmem [#allocation2], %s228
        %p230 = pneg %p43
        %p231 = pneg %p40
        %p232 = pneg %p64
        %p233 = pneg %p61
        %p234 = pneg %p85
        %p235 = pneg %p82
        %p236 = pneg %p106
        %p237 = pneg %p103
        %p238 = pneg %p132
        %p239 = pneg %p129
        %s240 = sand.u32 %s119, 1
        %s241 = scalar_lea.sflag [#allocation4], %s240
        %s242 = sand.u32 %s119, 1
        %s243 = smul.addr %s242, 16
        %s244 = scalar_lea.vmem [#allocation8], %s243
        %v246 = vld [vmem:[%s212] sm:$0xff]
        %v247 = vld [vmem:[%s212 + $0x8] sm:$0xff]
        %v248 = vld [vmem:[%s212 + $0x10] sm:$0xff]
        %v249 = vld [vmem:[%s212 + $0x18] sm:$0xff]
        %v250 = vld [vmem:[%s212 + $0x20] sm:$0xff]
        %v251 = vld [vmem:[%s212 + $0x28] sm:$0xff]
        %v252 = vld [vmem:[%s212 + $0x30] sm:$0xff]
        %v253 = vld [vmem:[%s212 + $0x38] sm:$0xff]
        %v254 = vld [vmem:[%s212 + $0x40] sm:$0xff]
        %v255 = vld [vmem:[%s212 + $0x48] sm:$0xff]
        %v256 = vld [vmem:[%s212 + $0x50] sm:$0xff]
        %v257 = vld [vmem:[%s212 + $0x58] sm:$0xff]
        %v258 = vpack.c.bf16 %v252, %v246
        %v259 = vpack.c.bf16 %v253, %v247
        %v260 = vpack.c.bf16 %v254, %v248
        %v261 = vpack.c.bf16 %v255, %v249
        %v262 = vpack.c.bf16 %v256, %v250
        %v263 = vpack.c.bf16 %v257, %v251
        %v264 = vld [vmem:[#allocation5] sm:$0xf]
        %v265 = vld [vmem:[#allocation5 + $0x4] sm:$0xf]
        %v266 = vld [vmem:[#allocation5 + $0x8] sm:$0xf]
        %v267 = vld [vmem:[#allocation5 + $0xc] sm:$0xf]
        %v268 = vld [vmem:[#allocation5 + $0x10] sm:$0xf]
        %v269 = vld [vmem:[#allocation5 + $0x14] sm:$0xf]
        %v270 = vld [vmem:[#allocation5 + $0x18] sm:$0xf]
        %v271 = vld [vmem:[#allocation5 + $0x1c] sm:$0xf]
        %v272 = vld [vmem:[#allocation5 + $0x20] sm:$0xf]
        %v273 = vld [vmem:[#allocation5 + $0x24] sm:$0xf]
        %v274 = vld [vmem:[#allocation5 + $0x28] sm:$0xf]
        %v275 = vld [vmem:[#allocation5 + $0x2c] sm:$0xf]
        %v276 = vld [vmem:[#allocation5 + $0x30] sm:$0xf]
        %v277 = vld [vmem:[#allocation5 + $0x34] sm:$0xf]
        %v278 = vld [vmem:[#allocation5 + $0x38] sm:$0xf]
        %v279 = vld [vmem:[#allocation5 + $0x3c] sm:$0xf]
        %v280 = vld [vmem:[#allocation5 + $0x40] sm:$0xf]
        %v281 = vld [vmem:[#allocation5 + $0x44] sm:$0xf]
        %v282 = vld [vmem:[#allocation5 + $0x48] sm:$0xf]
        %v283 = vld [vmem:[#allocation5 + $0x4c] sm:$0xf]
        %v284 = vld [vmem:[#allocation5 + $0x50] sm:$0xf]
        %v285 = vld [vmem:[#allocation5 + $0x54] sm:$0xf]
        %v286 = vld [vmem:[#allocation5 + $0x58] sm:$0xf]
        %v287 = vld [vmem:[#allocation5 + $0x5c] sm:$0xf]
        %v288 = vld [vmem:[#allocation5 + $0x60] sm:$0xf]
        %v289 = vld [vmem:[#allocation5 + $0x64] sm:$0xf]
        %v290 = vld [vmem:[#allocation5 + $0x68] sm:$0xf]
        %v291 = vld [vmem:[#allocation5 + $0x6c] sm:$0xf]
        %v292 = vld [vmem:[#allocation5 + $0x70] sm:$0xf]
        %v293 = vld [vmem:[#allocation5 + $0x74] sm:$0xf]
        %v294 = vld [vmem:[#allocation5 + $0x78] sm:$0xf]
        %v295 = vld [vmem:[#allocation5 + $0x7c] sm:$0xf]
        %v296 = vld [vmem:[#allocation5 + $0x80] sm:$0xf]
        %v297 = vld [vmem:[#allocation5 + $0x84] sm:$0xf]
        %v298 = vld [vmem:[#allocation5 + $0x88] sm:$0xf]
        %v299 = vld [vmem:[#allocation5 + $0x8c] sm:$0xf]
        %v300 = vld [vmem:[#allocation5 + $0x90] sm:$0xf]
        %v301 = vld [vmem:[#allocation5 + $0x94] sm:$0xf]
        %v302 = vld [vmem:[#allocation5 + $0x98] sm:$0xf]
        %v303 = vld [vmem:[#allocation5 + $0x9c] sm:$0xf]
        %v304 = vld [vmem:[#allocation5 + $0xa0] sm:$0xf]
        %v305 = vld [vmem:[#allocation5 + $0xa4] sm:$0xf]
        %v306 = vld [vmem:[#allocation5 + $0xa8] sm:$0xf]
        %v307 = vld [vmem:[#allocation5 + $0xac] sm:$0xf]
        %v308 = vld [vmem:[#allocation5 + $0xb0] sm:$0xf]
        %v309 = vld [vmem:[#allocation5 + $0xb4] sm:$0xf]
        %v310 = vld [vmem:[#allocation5 + $0xb8] sm:$0xf]
        %v311 = vld [vmem:[#allocation5 + $0xbc] sm:$0xf]
        %v312 = vld [vmem:[#allocation5 + $0xc0] sm:$0xf]
        %v313 = vld [vmem:[#allocation5 + $0xc4] sm:$0xf]
        %v314 = vld [vmem:[#allocation5 + $0xc8] sm:$0xf]
        %v315 = vld [vmem:[#allocation5 + $0xcc] sm:$0xf]
        %v316 = vld [vmem:[#allocation5 + $0xd0] sm:$0xf]
        %v317 = vld [vmem:[#allocation5 + $0xd4] sm:$0xf]
        %v318 = vld [vmem:[#allocation5 + $0xd8] sm:$0xf]
        %v319 = vld [vmem:[#allocation5 + $0xdc] sm:$0xf]
        %v320 = vld [vmem:[#allocation5 + $0xe0] sm:$0xf]
        %v321 = vld [vmem:[#allocation5 + $0xe4] sm:$0xf]
        %v322 = vld [vmem:[#allocation5 + $0xe8] sm:$0xf]
        %v323 = vld [vmem:[#allocation5 + $0xec] sm:$0xf]
        %v324 = vld [vmem:[#allocation5 + $0xf0] sm:$0xf]
        %v325 = vld [vmem:[#allocation5 + $0xf4] sm:$0xf]
        %v326 = vld [vmem:[#allocation5 + $0xf8] sm:$0xf]
        %v327 = vld [vmem:[#allocation5 + $0xfc] sm:$0xf]
        %v328 = vld [vmem:[#allocation5 + $0x100] sm:$0xf]
        %v329 = vld [vmem:[#allocation5 + $0x104] sm:$0xf]
        %v330 = vld [vmem:[#allocation5 + $0x108] sm:$0xf]
        %v331 = vld [vmem:[#allocation5 + $0x10c] sm:$0xf]
        %v332 = vld [vmem:[#allocation5 + $0x110] sm:$0xf]
        %v333 = vld [vmem:[#allocation5 + $0x114] sm:$0xf]
        %v334 = vld [vmem:[#allocation5 + $0x118] sm:$0xf]
        %v335 = vld [vmem:[#allocation5 + $0x11c] sm:$0xf]
        %v336 = vld [vmem:[#allocation5 + $0x120] sm:$0xf]
        %v337 = vld [vmem:[#allocation5 + $0x124] sm:$0xf]
        %v338 = vld [vmem:[#allocation5 + $0x128] sm:$0xf]
        %v339 = vld [vmem:[#allocation5 + $0x12c] sm:$0xf]
        %v340 = vld [vmem:[#allocation5 + $0x130] sm:$0xf]
        %v341 = vld [vmem:[#allocation5 + $0x134] sm:$0xf]
        %v342 = vld [vmem:[#allocation5 + $0x138] sm:$0xf]
        %v343 = vld [vmem:[#allocation5 + $0x13c] sm:$0xf]
        %v344 = vld [vmem:[#allocation5 + $0x140] sm:$0xf]
        %v345 = vld [vmem:[#allocation5 + $0x144] sm:$0xf]
        %v346 = vld [vmem:[#allocation5 + $0x148] sm:$0xf]
        %v347 = vld [vmem:[#allocation5 + $0x14c] sm:$0xf]
        %v348 = vld [vmem:[#allocation5 + $0x150] sm:$0xf]
        %v349 = vld [vmem:[#allocation5 + $0x154] sm:$0xf]
        %v350 = vld [vmem:[#allocation5 + $0x158] sm:$0xf]
        %v351 = vld [vmem:[#allocation5 + $0x15c] sm:$0xf]
        %v352 = vld [vmem:[#allocation5 + $0x160] sm:$0xf]
        %v353 = vld [vmem:[#allocation5 + $0x164] sm:$0xf]
        %v354 = vld [vmem:[#allocation5 + $0x168] sm:$0xf]
        %v355 = vld [vmem:[#allocation5 + $0x16c] sm:$0xf]
        %v356 = vld [vmem:[#allocation5 + $0x170] sm:$0xf]
        %v357 = vld [vmem:[#allocation5 + $0x174] sm:$0xf]
        %v358 = vld [vmem:[#allocation5 + $0x178] sm:$0xf]
        %v359 = vld [vmem:[#allocation5 + $0x17c] sm:$0xf]
        %v360 = vld [vmem:[%s2] sm:$0x1]
        %v362 = vlaneseq
        %v363 = vshrl.u32 %v362, 7
        %v364 = vsub.s32 0, %v363
        %v365 = vrot.slane %v360, %v364
        %v463 = vunpack.c.l.b16 %v264
        %v464 = vunpack.c.l.b16 %v265
        %v465 = vunpack.c.l.b16 %v266
        %v466 = vunpack.c.l.b16 %v267
        %v467 = vunpack.c.l.b16 %v268
        %v468 = vunpack.c.l.b16 %v269
        %v469 = vunpack.c.l.b16 %v270
        %v470 = vunpack.c.l.b16 %v271
        %v471 = vunpack.c.l.b16 %v272
        %v472 = vunpack.c.l.b16 %v273
        %v473 = vunpack.c.l.b16 %v274
        %v474 = vunpack.c.l.b16 %v275
        %v475 = vunpack.c.l.b16 %v276
        %v476 = vunpack.c.l.b16 %v277
        %v477 = vunpack.c.l.b16 %v278
        %v478 = vunpack.c.l.b16 %v279
        %v479 = vunpack.c.l.b16 %v280
        %v480 = vunpack.c.l.b16 %v281
        %v481 = vunpack.c.l.b16 %v282
        %v482 = vunpack.c.l.b16 %v283
        %v483 = vunpack.c.l.b16 %v284
        %v484 = vunpack.c.l.b16 %v285
        %v485 = vunpack.c.l.b16 %v286
        %v486 = vunpack.c.l.b16 %v287
        %v487 = vunpack.c.l.b16 %v288
        %v488 = vunpack.c.l.b16 %v289
        %v489 = vunpack.c.l.b16 %v290
        %v490 = vunpack.c.l.b16 %v291
        %v491 = vunpack.c.l.b16 %v292
        %v492 = vunpack.c.l.b16 %v293
        %v493 = vunpack.c.l.b16 %v294
        %v494 = vunpack.c.l.b16 %v295
        %v495 = vunpack.c.l.b16 %v296
        %v496 = vunpack.c.l.b16 %v297
        %v497 = vunpack.c.l.b16 %v298
        %v498 = vunpack.c.l.b16 %v299
        %v499 = vunpack.c.l.b16 %v300
        %v500 = vunpack.c.l.b16 %v301
        %v501 = vunpack.c.l.b16 %v302
        %v502 = vunpack.c.l.b16 %v303
        %v503 = vunpack.c.l.b16 %v304
        %v504 = vunpack.c.l.b16 %v305
        %v505 = vunpack.c.l.b16 %v306
        %v506 = vunpack.c.l.b16 %v307
        %v507 = vunpack.c.l.b16 %v308
        %v508 = vunpack.c.l.b16 %v309
        %v509 = vunpack.c.l.b16 %v310
        %v510 = vunpack.c.l.b16 %v311
        %v511 = vunpack.c.l.b16 %v312
        %v512 = vunpack.c.l.b16 %v313
        %v513 = vunpack.c.l.b16 %v314
        %v514 = vunpack.c.l.b16 %v315
        %v515 = vunpack.c.l.b16 %v316
        %v516 = vunpack.c.l.b16 %v317
        %v517 = vunpack.c.l.b16 %v318
        %v518 = vunpack.c.l.b16 %v319
        %v519 = vunpack.c.l.b16 %v320
        %v520 = vunpack.c.l.b16 %v321
        %v521 = vunpack.c.l.b16 %v322
        %v522 = vunpack.c.l.b16 %v323
        %v523 = vunpack.c.l.b16 %v324
        %v524 = vunpack.c.l.b16 %v325
        %v525 = vunpack.c.l.b16 %v326
        %v526 = vunpack.c.l.b16 %v327
        %v527 = vunpack.c.l.b16 %v328
        %v528 = vunpack.c.l.b16 %v329
        %v529 = vunpack.c.l.b16 %v330
        %v530 = vunpack.c.l.b16 %v331
        %v531 = vunpack.c.l.b16 %v332
        %v532 = vunpack.c.l.b16 %v333
        %v533 = vunpack.c.l.b16 %v334
        %v534 = vunpack.c.l.b16 %v335
        %v535 = vunpack.c.l.b16 %v336
        %v536 = vunpack.c.l.b16 %v337
        %v537 = vunpack.c.l.b16 %v338
        %v538 = vunpack.c.l.b16 %v339
        %v539 = vunpack.c.l.b16 %v340
        %v540 = vunpack.c.l.b16 %v341
        %v541 = vunpack.c.l.b16 %v342
        %v542 = vunpack.c.l.b16 %v343
        %v543 = vunpack.c.l.b16 %v344
        %v544 = vunpack.c.l.b16 %v345
        %v545 = vunpack.c.l.b16 %v346
        %v546 = vunpack.c.l.b16 %v347
        %v547 = vunpack.c.l.b16 %v348
        %v548 = vunpack.c.l.b16 %v349
        %v549 = vunpack.c.l.b16 %v350
        %v550 = vunpack.c.l.b16 %v351
        %v551 = vunpack.c.l.b16 %v352
        %v552 = vunpack.c.l.b16 %v353
        %v553 = vunpack.c.l.b16 %v354
        %v554 = vunpack.c.l.b16 %v355
        %v555 = vunpack.c.l.b16 %v356
        %v556 = vunpack.c.l.b16 %v357
        %v557 = vunpack.c.l.b16 %v358
        %v558 = vunpack.c.l.b16 %v359
        %v559 = vpack.c.b16 %v464, %v463
        %v560 = vpack.c.b16 %v466, %v465
        %v561 = vpack.c.b16 %v468, %v467
        %v562 = vpack.c.b16 %v470, %v469
        %v563 = vpack.c.b16 %v472, %v471
        %v564 = vpack.c.b16 %v474, %v473
        %v565 = vpack.c.b16 %v476, %v475
        %v566 = vpack.c.b16 %v478, %v477
        %v567 = vpack.c.b16 %v480, %v479
        %v568 = vpack.c.b16 %v482, %v481
        %v569 = vpack.c.b16 %v484, %v483
        %v570 = vpack.c.b16 %v486, %v485
        %v571 = vpack.c.b16 %v488, %v487
        %v572 = vpack.c.b16 %v490, %v489
        %v573 = vpack.c.b16 %v492, %v491
        %v574 = vpack.c.b16 %v494, %v493
        %v575 = vpack.c.b16 %v496, %v495
        %v576 = vpack.c.b16 %v498, %v497
        %v577 = vpack.c.b16 %v500, %v499
        %v578 = vpack.c.b16 %v502, %v501
        %v579 = vpack.c.b16 %v504, %v503
        %v580 = vpack.c.b16 %v506, %v505
        %v581 = vpack.c.b16 %v508, %v507
        %v582 = vpack.c.b16 %v510, %v509
        %v583 = vpack.c.b16 %v512, %v511
        %v584 = vpack.c.b16 %v514, %v513
        %v585 = vpack.c.b16 %v516, %v515
        %v586 = vpack.c.b16 %v518, %v517
        %v587 = vpack.c.b16 %v520, %v519
        %v588 = vpack.c.b16 %v522, %v521
        %v589 = vpack.c.b16 %v524, %v523
        %v590 = vpack.c.b16 %v526, %v525
        %v591 = vpack.c.b16 %v528, %v527
        %v592 = vpack.c.b16 %v530, %v529
        %v593 = vpack.c.b16 %v532, %v531
        %v594 = vpack.c.b16 %v534, %v533
        %v595 = vpack.c.b16 %v536, %v535
        %v596 = vpack.c.b16 %v538, %v537
        %v597 = vpack.c.b16 %v540, %v539
        %v598 = vpack.c.b16 %v542, %v541
        %v599 = vpack.c.b16 %v544, %v543
        %v600 = vpack.c.b16 %v546, %v545
        %v601 = vpack.c.b16 %v548, %v547
        %v602 = vpack.c.b16 %v550, %v549
        %v603 = vpack.c.b16 %v552, %v551
        %v604 = vpack.c.b16 %v554, %v553
        %v605 = vpack.c.b16 %v556, %v555
        %v606 = vpack.c.b16 %v558, %v557
        %655 = vmatprep.subr.bf16.mxu0 0
        %656 = vmatpush1.bf16.msra.mxu0 %v566
        %657 = vmatprep.subr.bf16.mxu0 0
        %658 = vmatpush1.bf16.msra.mxu0 %v565
        %659 = vmatprep.subr.bf16.mxu0 0
        %660 = vmatpush1.bf16.msra.mxu0 %v564
        %661 = vmatprep.subr.bf16.mxu0 0
        %662 = vmatpush1.bf16.msra.mxu0 %v563
        %663 = vmatprep.subr.bf16.mxu0 0
        %664 = vmatpush1.bf16.msra.mxu0 %v562
        %665 = vmatprep.subr.bf16.mxu0 0
        %666 = vmatpush1.bf16.msra.mxu0 %v561
        %667 = vmatprep.subr.bf16.mxu0 0
        %668 = vmatpush1.bf16.msra.mxu0 %v560
        %669 = vmatprep.subr.bf16.mxu0 0
        %670 = vmatpush1.bf16.msra.mxu0 %v559
        %671 = vmatprep.subr.bf16.mxu0 0
        %672 = vmatpush2.bf16.msra.mxu0 %v574
        %673 = vmatprep.subr.bf16.mxu0 0
        %674 = vmatpush2.bf16.msra.mxu0 %v573
        %675 = vmatprep.subr.bf16.mxu0 0
        %676 = vmatpush2.bf16.msra.mxu0 %v572
        %677 = vmatprep.subr.bf16.mxu0 0
        %678 = vmatpush2.bf16.msra.mxu0 %v571
        %679 = vmatprep.subr.bf16.mxu0 0
        %680 = vmatpush2.bf16.msra.mxu0 %v570
        %681 = vmatprep.subr.bf16.mxu0 0
        %682 = vmatpush2.bf16.msra.mxu0 %v569
        %683 = vmatprep.subr.bf16.mxu0 0
        %684 = vmatpush2.bf16.msra.mxu0 %v568
        %685 = vmatprep.subr.bf16.mxu0 0
        %686 = vmatpush2.bf16.msra.mxu0 %v567
        %687 = vmatprep.mubr.bf16.mxu0 %v259
        %688 = vmatmul.mubr.bf16.gmra.mxu0 %v258
        %v689 = vpop.f32.mrf.mxu0
        %v690 = vadd.f32 %v365, %v689
        %v691 = vpop.f32.mrf.mxu0
        %v692 = vpop.f32.mrf.mxu0
        %v693 = vadd.f32 %v365, %v692
        %v694 = vpop.f32.mrf.mxu0
        %695 = vdwg.mxu0
        %696 = vmatprep.subr.bf16.mxu0 0
        %697 = vmatpush1.bf16.msra.mxu0 %v582
        %698 = vmatprep.subr.bf16.mxu0 0
        %699 = vmatpush1.bf16.msra.mxu0 %v581
        %700 = vmatprep.subr.bf16.mxu0 0
        %701 = vmatpush1.bf16.msra.mxu0 %v580
        %702 = vmatprep.subr.bf16.mxu0 0
        %703 = vmatpush1.bf16.msra.mxu0 %v579
        %704 = vmatprep.subr.bf16.mxu0 0
        %705 = vmatpush1.bf16.msra.mxu0 %v578
        %706 = vmatprep.subr.bf16.mxu0 0
        %707 = vmatpush1.bf16.msra.mxu0 %v577
        %708 = vmatprep.subr.bf16.mxu0 0
        %709 = vmatpush1.bf16.msra.mxu0 %v576
        %710 = vmatprep.subr.bf16.mxu0 0
        %711 = vmatpush1.bf16.msra.mxu0 %v575
        %712 = vmatprep.subr.bf16.mxu0 0
        %713 = vmatpush2.bf16.msra.mxu0 %v590
        %714 = vmatprep.subr.bf16.mxu0 0
        %715 = vmatpush2.bf16.msra.mxu0 %v589
        %716 = vmatprep.subr.bf16.mxu0 0
        %717 = vmatpush2.bf16.msra.mxu0 %v588
        %718 = vmatprep.subr.bf16.mxu0 0
        %719 = vmatpush2.bf16.msra.mxu0 %v587
        %720 = vmatprep.subr.bf16.mxu0 0
        %721 = vmatpush2.bf16.msra.mxu0 %v586
        %722 = vmatprep.subr.bf16.mxu0 0
        %723 = vmatpush2.bf16.msra.mxu0 %v585
        %724 = vmatprep.subr.bf16.mxu0 0
        %725 = vmatpush2.bf16.msra.mxu0 %v584
        %726 = vmatprep.subr.bf16.mxu0 0
        %727 = vmatpush2.bf16.msra.mxu0 %v583
        %728 = vmatprep.mubr.bf16.mxu0 %v261
        %729 = vmatmul.mubr.bf16.gmra.mxu0 %v260
        %v730 = vpop.f32.mrf.mxu0
        %v731 = vadd.f32 %v690, %v730
        %v732 = vpop.f32.mrf.mxu0
        %v733 = vpop.f32.mrf.mxu0
        %v734 = vadd.f32 %v693, %v733
        %v735 = vpop.f32.mrf.mxu0
        %736 = vdwg.mxu0
        %737 = vmatprep.subr.bf16.mxu0 0
        %738 = vmatpush1.bf16.msra.mxu0 %v598
        %739 = vmatprep.subr.bf16.mxu0 0
        %740 = vmatpush1.bf16.msra.mxu0 %v597
        %741 = vmatprep.subr.bf16.mxu0 0
        %742 = vmatpush1.bf16.msra.mxu0 %v596
        %743 = vmatprep.subr.bf16.mxu0 0
        %744 = vmatpush1.bf16.msra.mxu0 %v595
        %745 = vmatprep.subr.bf16.mxu0 0
        %746 = vmatpush1.bf16.msra.mxu0 %v594
        %747 = vmatprep.subr.bf16.mxu0 0
        %748 = vmatpush1.bf16.msra.mxu0 %v593
        %749 = vmatprep.subr.bf16.mxu0 0
        %750 = vmatpush1.bf16.msra.mxu0 %v592
        %751 = vmatprep.subr.bf16.mxu0 0
        %752 = vmatpush1.bf16.msra.mxu0 %v591
        %753 = vmatprep.subr.bf16.mxu0 0
        %754 = vmatpush2.bf16.msra.mxu0 %v606
        %755 = vmatprep.subr.bf16.mxu0 0
        %756 = vmatpush2.bf16.msra.mxu0 %v605
        %757 = vmatprep.subr.bf16.mxu0 0
        %758 = vmatpush2.bf16.msra.mxu0 %v604
        %759 = vmatprep.subr.bf16.mxu0 0
        %760 = vmatpush2.bf16.msra.mxu0 %v603
        %761 = vmatprep.subr.bf16.mxu0 0
        %762 = vmatpush2.bf16.msra.mxu0 %v602
        %763 = vmatprep.subr.bf16.mxu0 0
        %764 = vmatpush2.bf16.msra.mxu0 %v601
        %765 = vmatprep.subr.bf16.mxu0 0
        %766 = vmatpush2.bf16.msra.mxu0 %v600
        %767 = vmatprep.subr.bf16.mxu0 0
        %768 = vmatpush2.bf16.msra.mxu0 %v599
        %769 = vmatprep.mubr.bf16.mxu0 %v263
        %770 = vmatmul.mubr.bf16.gmra.mxu0 %v262
        %v771 = vpop.f32.mrf.mxu0
        %v772 = vadd.f32 %v731, %v771
        %v773 = vpop.f32.mrf.mxu0
        %v774 = vpop.f32.mrf.mxu0
        %v775 = vadd.f32 %v734, %v774
        %v776 = vpop.f32.mrf.mxu0
        %777 = vdwg.mxu0
        %v778 = vld [vmem:[#allocation7] sm:$0xff]
        %v779 = vld [vmem:[#allocation7 + $0x8] sm:$0xff]
        %v780 = vadd.f32 %v772, %v778
        %v781 = vadd.f32 %v775, %v779
        %782 = vst [vmem:[%s244] sm:$0xff] %v780
        %783 = vst [vmem:[%s244 + $0x8] sm:$0xff] %v781
        %s784 = sand.u32 %s119, 1
        %s785 = scalar_lea.sflag [#allocation4], %s784
        %s786 = sand.u32 %s119, 1
        %s787 = smul.addr %s786, 16
        %s788 = scalar_lea.vmem [#allocation8], %s787
        // Predicated region
        $region49: #{tpu_custom_call.1} parent=35 // pred_check
          %p789 = pneg %p129
        $region50: #{tpu_custom_call.1} parent=35 // pred_check_branch
          %791 = sbr.rel (%p789) target = $region52
        $region51: #{tpu_custom_call.1} parent=35 // pred_region
          %s793 = ssub.s32 256, 256
          %794 = vsyncadd %s785, %s793
          %s795 = smul.addr %s22, 2
          %s796 = smul.addr %s795, 128
          %s797 = scalar_lea.hbm %s4, %s796
          %s798 = sshll.u32 %s788, 4
          %s799 = int_to_ptr.vmem [resolvable:$true] %s798
          %804 = dma.vmem_to_hbm [thread:$0]  %s799, 256, %s797, %s785, 128, 128, 8
        $region52: #{tpu_custom_call.1} parent=35 // pred_fallthru
          _
      $region36: #{tpu_custom_call.1} parent=5 // pred_fallthru
        _
      %p805 = scmp.le.s32.totalorder 2, %s17
      // Predicated region
      $region53: #{tpu_custom_call.1} parent=5 // pred_check
        %p806 = pneg %p805
      $region54: #{tpu_custom_call.1} parent=5 // pred_check_branch
        %808 = sbr.rel (%p806) target = $region56
      $region55: #{tpu_custom_call.1} parent=5 // pred_region
        %s809 = ssub.s32 %s17, 2
        // Predicated region
        $region57: #{tpu_custom_call.1} parent=55 // pred_check
          %p810 = pneg %p135
        $region58: #{tpu_custom_call.1} parent=55 // pred_check_branch
          %812 = sbr.rel (%p810) target = $region60
        $region59: #{tpu_custom_call.1} parent=55 // pred_region
          %s813 = sand.u32 %s120, 1
          %s814 = scalar_lea.sflag [#allocation4], %s813
          %s815 = sand.u32 %s120, 1
          %s816 = smul.addr %s815, 16
          %s817 = scalar_lea.vmem [#allocation8], %s816
          %818 = dma.done %s814, 256
        $region60: #{tpu_custom_call.1} parent=55 // pred_fallthru
          _
      $region56: #{tpu_custom_call.1} parent=5 // pred_fallthru
        _
    $region6: #{tpu_custom_call.1} parent=1 // loop_footer
      %s21 = sadd.s32 1, %s17
    $region7: #{tpu_custom_call.1} parent=1 // loop_footer_branch
      %16 = sbr.rel target = $region3
    $region8: #{tpu_custom_call.1} parent=1 // loop_exit
      _
    %819 = vsyncpa [#allocation3], 1
    %s820 = scalar_lea.sflag [#allocation3], 1
    %821 = vsyncpa %s820, 1
    %822 = vsyncpa [#allocation6], 1
    %823 = vsyncpa [#allocation4], 1
    %s824 = scalar_lea.sflag [#allocation4], 1
    %825 = vsyncpa %s824, 1

</llo_original>
